<compile_context>
chip_gen: v7x
topology: tpu7x:2x2x1
jax: 0.10.0
libtpu: 0.0.40
codegen_flags: <defaults>
</compile_context>

<pallas_src>
import math

import jax
import jax.numpy as jnp
from jax.experimental import pallas as pl
from jax.experimental.pallas import tpu as pltpu

EPS = 1e-5  # nn.LayerNorm default (affine weight=1 / bias=0 at init)


def _round_up(x, m):
    return ((x + m - 1) // m) * m


def _ln(h):
    mu = jnp.mean(h, axis=-1, keepdims=True)
    var = jnp.mean(jnp.square(h - mu), axis=-1, keepdims=True)
    return (h - mu) * jax.lax.rsqrt(var + EPS)


def _softmax_last(s):
    s = s - jnp.max(s, axis=-1, keepdims=True)
    p = jnp.exp(s)
    return p * pl.reciprocal(jnp.sum(p, axis=-1, keepdims=True), approx=True)


def _const_spec(w):
    nd = w.ndim
    return pl.BlockSpec(w.shape, lambda b, _nd=nd: (0,) * _nd)


# --------------------------------------------------------------------------
# node_init : 5-layer MLP (Linear+ReLU+LN)x4 + Linear, row-tiled pipeline
# --------------------------------------------------------------------------
def _init_mlp_kernel(x_ref, w0, b0, w1, b1, w2, b2, w3, b3, w4, b4, o_ref):
    h = x_ref[...]
    for w, b in ((w0, b0), (w1, b1), (w2, b2), (w3, b3)):
        h = _ln(jnp.maximum(
            jnp.dot(h, w[...], preferred_element_type=jnp.float32) + b[...], 0.0))
    o_ref[...] = jnp.dot(h, w4[...], preferred_element_type=jnp.float32) + b4[...]


def init_mlp(x, layers, tile_m=256):
    """x: [M, din] (din <= 8) -> [M, 32], streamed over 256-row blocks."""
    M, din = x.shape
    w0, b0 = layers[0]
    pad_c = 8 - din                     # zero-pad tiny contraction dim (exact)
    tm = tile_m if M > tile_m else _round_up(M, 8)
    Mp = _round_up(M, tm)
    xp = jnp.pad(x, ((0, Mp - M), (0, pad_c)))
    w0p = jnp.pad(w0, ((0, pad_c), (0, 0)))
    args = [xp, w0p, b0]
    for w, b in layers[1:]:
        args += [w, b]
    out = pl.pallas_call(
        _init_mlp_kernel,
        out_shape=jax.ShapeDtypeStruct((Mp, 32), jnp.float32),
        grid=(Mp // tm,),
        in_specs=[pl.BlockSpec((tm, 8), lambda i: (i, 0))]
                 + [_const_spec(w) for w in args[1:]],
        out_specs=pl.BlockSpec((tm, 32), lambda i: (i, 0)),
        compiler_params=pltpu.CompilerParams(dimension_semantics=("parallel",)),
    )(*args)
    return out[:M]


# --------------------------------------------------------------------------
# Fused message passing: per grid step handles Bt graphs; for each graph runs
# the in-kernel dis_init MLP once, then 3 x [4x intra + 3x inter], writing
# only the final-iteration edge log-softmax row (what torch returns).
# --------------------------------------------------------------------------
def _fused_mp_kernel(fx_ref, ax_ref, lfx_ref, lagx_ref, dis_ref,
                     wqkv, bqkv, wint, bint,
                     be1, we2r, be2,
                     wn1, bn1, wn2, bn2, we1c,
                     dw0, db0, dw1, db1, dw2, db2, dw3, db3, dw4, db4,
                     e_ref):
    Bt, G, _ = fx_ref.shape
    A = ax_ref.shape[1]

    # ---- small weights loaded once (VMEM/vreg resident for the whole step) ----
    wqkv_, bqkv_ = wqkv[...], bqkv[...]
    wint_, bint_ = wint[...], bint[...]
    be1_, we2_, be2_ = be1[...], we2r[...], be2[...]
    wn1a = wn1[0:32, :]          # node_mlp first layer split by input chunk
    wn1b = wn1[32:64, :]
    bn1_ = bn1[...]
    wn2_, bn2_ = wn2[...], bn2[...]
    we1c_ = we1c[...]
    # dis=None in torch concatenates an all-ones 32-wide chunk; through the
    # edge-MLP first layer that is just the column sum of we1[64:96].
    hd_ones = jnp.sum(we1c_, axis=0, keepdims=True)[None, :, :]      # [1,1,32]

    def mm(a, w):
        return jnp.dot(a, w, preferred_element_type=jnp.float32)

    def node_mlp(x, attn):
        h = mm(x, wn1a) + mm(attn, wn1b) + bn1_
        h = _ln(jnp.maximum(h, 0.0))
        return mm(h, wn2_) + bn2_

    def intra(x):
        p = mm(x, wqkv_) + bqkv_            # one [N,96] projection = q | k | v
        q = p[:, 0:32]
        k = p[:, 32:64]
        v = p[:, 64:96]
        s = jax.lax.dot_general(q, k, (((1,), (1,)), ((), ())),
                                preferred_element_type=jnp.float32)
        e = _softmax_last(s)
        return x + node_mlp(x, mm(e, v))

    def edge_scores(ha, hb, hd):
        # score[i, j] = edge_mlp( ha[i] + hb[j] + hd[i, j] )
        h = ha[:, None, :] + hb[None, :, :] + hd + be1_
        h = _ln(jnp.maximum(h, 0.0))
        return jnp.sum(h * we2_, axis=-1) + be2_                     # [Ni, Nj]

    def inter(x, y, hd, need_e):
        # Pre-fused projections: wint = (Wq@We1a | Wk@We1b | Wv)
        px = mm(x, wint_) + bint_
        py = mm(y, wint_) + bint_
        xeq, xek, xv = px[:, 0:32], px[:, 32:64], px[:, 64:96]
        yeq, yek, yv = py[:, 0:32], py[:, 32:64], py[:, 64:96]

        score = edge_scores(xeq, yek, hd)                            # [Nx, Ny]
        # copy direction computed in [Nx, Ny] layout then a tiny 2-D transpose
        # (avoids ever materializing a transposed dis tensor).
        score_c = edge_scores(xek, yeq, hd).T                        # [Ny, Nx]

        e = _softmax_last(score)
        e_c = _softmax_last(score_c)
        x_new = x + node_mlp(x, mm(e, yv))
        y_new = y + node_mlp(y, mm(e_c, xv))

        if need_e:
            # torch: e_all.append((F.log_softmax(score, dim=0) * 15)[0])
            s0 = score - jnp.max(score, axis=0, keepdims=True)
            log_e = (s0 - jnp.log(jnp.sum(jnp.exp(s0), axis=0, keepdims=True))) * 15.0
            return log_e[0:1, :], x_new, y_new
        return None, x_new, y_new

    @pl.loop(0, Bt)      # Bt graphs per grid step: amortizes per-step overhead
    def _(ib):
        fx = fx_ref[ib]          # [G, 32]  frontier / ghost nodes
        ax = ax_ref[ib]          # [A, 32]  agent nodes
        lfx = lfx_ref[ib]        # [S, 32]  last-frontier nodes
        lagx = lagx_ref[ib]      # [S, 32]  last-agent nodes

        # dis_init MLP fused in-kernel, run ONCE per graph (loop-invariant over
        # the 3 MP iterations) and pre-projected through the edge-MLP chunk.
        h = dis_ref[ib].reshape(A * G, 8)
        for w, b in ((dw0, db0), (dw1, db1), (dw2, db2), (dw3, db3)):
            h = _ln(jnp.maximum(mm(h, w[...]) + b[...], 0.0))
        h = mm(h, dw4[...]) + db4[...]                    # dis_init output [A*G,32]
        hd = mm(h, we1c_).reshape(A, G, 32)               # pre-projected distances

        def mp_iter(state, need_e):
            fx, ax, lfx, lagx = state
            fx, ax, lfx, lagx = intra(fx), intra(ax), intra(lfx), intra(lagx)
            _, lfx, fx = inter(lfx, fx, hd_ones, False)
            _, lagx, ax = inter(lagx, ax, hd_ones, False)
            e, ax, fx = inter(ax, fx, hd, need_e)
            return (fx, ax, lfx, lagx), e

        # First 2 iterations under fori_loop (bounded live ranges); last
        # iteration peeled so the log-softmax epilogue runs exactly once.
        state = (fx, ax, lfx, lagx)
        state = jax.lax.fori_loop(0, 2, lambda i, s: mp_iter(s, False)[0], state)
        _, e_last = mp_iter(state, True)
        e_ref[ib] = e_last                                # [1, G]


def _pick_bt(batch, cap=8):
    """Largest divisor of `batch` that is <= cap (graphs per grid step)."""
    for bt in range(min(batch, cap), 0, -1):
        if batch % bt == 0:
            return bt
    return 1


def fused_message_passing(frontier_x, agent_x, last_frontier_x, last_agent_x,
                          dis_pad, params):
    B, G, D = frontier_x.shape
    A = agent_x.shape[1]
    S = last_frontier_x.shape[1]
    Bt = _pick_bt(B)

    wq, bq = params['query']
    wk, bk = params['key']
    wv, bv = params['value']
    we1, be1, we2r, be2 = params['edge_mlp']
    wn1, bn1, wn2, bn2 = params['node_mlp']
    we1a, we1b, we1c = we1[0:32], we1[32:64], we1[64:96]

    # Pre-fused projection chains (computed once, outside the kernel):
    #   intra:  x @ (Wq | Wk | Wv)
    #   inter:  x @ (Wq@We1a | Wk@We1b | Wv)   -- q/k are only ever consumed
    #           through the edge-MLP first-layer chunks, so fuse the chain.
    wqkv = jnp.concatenate([wq, wk, wv], axis=1)
    bqkv = jnp.concatenate([bq, bk, bv], axis=1)
    wint = jnp.concatenate([wq @ we1a, wk @ we1b, wv], axis=1)
    bint = jnp.concatenate([bq @ we1a, bk @ we1b, bv], axis=1)

    # dis_init weights (first layer zero-padded 1 -> 8 on the input dim; exact).
    (dw0, db0), rest = params['dis_init'][0], params['dis_init'][1:]
    dw0p = jnp.pad(dw0, ((0, 8 - dw0.shape[0]), (0, 0)))
    dis_w = [dw0p, db0]
    for w, b in rest:
        dis_w += [w, b]

    weights = [wqkv, bqkv, wint, bint, be1, we2r, be2,
               wn1, bn1, wn2, bn2, we1c] + dis_w

    e_all = pl.pallas_call(
        _fused_mp_kernel,
        out_shape=jax.ShapeDtypeStruct((B, 1, G), jnp.float32),
        grid=(B // Bt,),
        in_specs=[pl.BlockSpec((Bt, G, D), lambda b: (b, 0, 0)),
                  pl.BlockSpec((Bt, A, D), lambda b: (b, 0, 0)),
                  pl.BlockSpec((Bt, S, D), lambda b: (b, 0, 0)),
                  pl.BlockSpec((Bt, S, D), lambda b: (b, 0, 0)),
                  pl.BlockSpec((Bt, A, G, 8), lambda b: (b, 0, 0, 0))]
                 + [_const_spec(w) for w in weights],
        out_specs=pl.BlockSpec((Bt, 1, G), lambda b: (b, 0, 0)),
        compiler_params=pltpu.CompilerParams(dimension_semantics=("parallel",)),
    )(frontier_x, agent_x, last_frontier_x, last_agent_x, dis_pad, *weights)
    return e_all[:, 0, :]


# --------------------------------------------------------------------------
# parameters (deterministic orthogonal init with gain=sqrt(2), zero biases)
# --------------------------------------------------------------------------
def make_params(key):
    gain = math.sqrt(2.0)
    keys = iter(jax.random.split(key, 32))

    def linear(din, dout):
        w = jax.nn.initializers.orthogonal(scale=gain)(next(keys), (din, dout), jnp.float32)
        b = jnp.zeros((1, dout), jnp.float32)
        return w, b

    def init_stack(din):
        dims = [din, 32, 64, 128, 256, 32]
        return [linear(dims[i], dims[i + 1]) for i in range(5)]

    params = {
        'node_init': init_stack(4),
        'dis_init': init_stack(1),
        'query': linear(32, 32),
        'key': linear(32, 32),
        'value': linear(32, 32),
    }
    we1, be1 = linear(96, 32)
    we2, be2 = linear(32, 1)
    params['edge_mlp'] = (we1, be1, we2.reshape(1, 32), be2)   # be2 is (1,1)
    wn1, bn1 = linear(64, 64)
    wn2, bn2 = linear(64, 32)
    params['node_mlp'] = (wn1, bn1, wn2, bn2)
    return params


# --------------------------------------------------------------------------
# Perception_Graph.forward (use_frontier_nodes = False)
# --------------------------------------------------------------------------
def perception_graph_forward(params, obs, num_agents):
    B = obs['graph_ghost_node_position'].shape[0]
    A = num_agents
    # TODO(synk): the torch module uses ragged, data-dependent per-batch node
    # counts (boolean masking); here the counts are read host-side once and all
    # batch elements must share one ghost count (no in-kernel masking).
    global_step = int(obs['graph_last_pos_mask'][0].sum())
    ghost_counts = [int(obs['graph_merge_ghost_mask'][i].sum()) for i in range(B)]
    assert all(c == ghost_counts[0] for c in ghost_counts)
    G = ghost_counts[0]
    S = global_step

    ghost_pos = obs['graph_ghost_node_position'][:, :G].reshape(B * G, 4)
    agent_pos = obs['agent_world_pos'].reshape(B * A, 4)
    last_ghost = obs['graph_last_ghost_node_position'][:, :S].reshape(B * S, 4)
    last_agent = obs['graph_last_agent_world_pos'][:, :S].reshape(B * S, 4)

    # One row-tiled node_init launch over every position row.
    all_pos = jnp.concatenate([ghost_pos, agent_pos, last_ghost, last_agent], axis=0)
    feats = init_mlp(all_pos, params['node_init'])
    o0 = B * G
    o1 = o0 + B * A
    o2 = o1 + B * S
    frontier_x = feats[:o0].reshape(B, G, 32)
    agent_x = feats[o0:o1].reshape(B, A, 32)
    last_frontier_x = feats[o1:o2].reshape(B, S, 32)
    last_agent_x = feats[o2:].reshape(B, S, 32)

    # Raw per-edge distances; dis_init is fused into the message-passing kernel,
    # so no [B, A, G, 32] feature tensor is ever written to / read from HBM.
    dis_raw = obs['graph_agent_dis'][:, :, :G, :]                  # [B, A, G, 1]
    dis_pad = jnp.pad(dis_raw, ((0, 0), (0, 0), (0, 0), (0, 7)))   # pad 1 -> 8

    # e_all: [B, G] (torch returns this as a list of per-batch vectors, last
    # message-passing iteration only -- e_all is overwritten each iteration).
    return fused_message_passing(frontier_x, agent_x, last_frontier_x,
                                 last_agent_x, dis_pad, params)


if __name__ == "__main__":
    B, A, MAXG, G, MAXS, S = 2, 2, 12, 8, 6, 4
    key = jax.random.PRNGKey(0)
    ks = jax.random.split(key, 8)
    ghost_mask = jnp.concatenate([jnp.ones((B, G)), jnp.zeros((B, MAXG - G))], axis=1)
    last_mask = jnp.concatenate([jnp.ones((B, S)), jnp.zeros((B, MAXS - S))], axis=1)
    observations = {
        'graph_ghost_node_position': jax.random.normal(ks[0], (B, MAXG, 4), jnp.float32),
        'graph_merge_ghost_mask': ghost_mask,
        'graph_agent_dis': jax.random.uniform(ks[1], (B, A, MAXG, 1), jnp.float32),
        'agent_world_pos': jax.random.normal(ks[2], (B, A, 4), jnp.float32),
        'graph_last_pos_mask': last_mask,
        'graph_last_ghost_node_position': jax.random.normal(ks[3], (B, MAXS, 4), jnp.float32),
        'graph_last_agent_world_pos': jax.random.normal(ks[4], (B, MAXS, 4), jnp.float32),
    }
    params = make_params(jax.random.PRNGKey(1))
    e_all = perception_graph_forward(params, observations, num_agents=A)
    jax.block_until_ready(e_all)
    print("KERNEL_OK")
</pallas_src>

<mosaic_0001>
module attributes {stable_mosaic.version = 11 : i64} {
  func.func @_init_mlp_kernel(%arg0: i32, %arg1: memref<40x8xf32, #tpu.memory_space<vmem>>, %arg2: memref<8x32xf32, #tpu.memory_space<vmem>>, %arg3: memref<1x32xf32, #tpu.memory_space<vmem>>, %arg4: memref<32x64xf32, #tpu.memory_space<vmem>>, %arg5: memref<1x64xf32, #tpu.memory_space<vmem>>, %arg6: memref<64x128xf32, #tpu.memory_space<vmem>>, %arg7: memref<1x128xf32, #tpu.memory_space<vmem>>, %arg8: memref<128x256xf32, #tpu.memory_space<vmem>>, %arg9: memref<1x256xf32, #tpu.memory_space<vmem>>, %arg10: memref<256x32xf32, #tpu.memory_space<vmem>>, %arg11: memref<1x32xf32, #tpu.memory_space<vmem>>, %arg12: memref<40x32xf32, #tpu.memory_space<vmem>>) attributes {dimension_semantics = [#tpu.dimension_semantics<parallel>], iteration_bounds = array<i64: 1>, scalar_prefetch = 0 : i64, scratch_operands = 0 : i64, tpu.core_type = #tpu.core_type<tc>, window_params = [{transform_indices = @transform_0, window_bounds = array<i64: 40, 8>}, {pipeline_mode = #tpu.pipeline_mode<synchronous>, transform_indices = @transform_1, window_bounds = array<i64: 8, 32>}, {pipeline_mode = #tpu.pipeline_mode<synchronous>, transform_indices = @transform_2, window_bounds = array<i64: 1, 32>}, {pipeline_mode = #tpu.pipeline_mode<synchronous>, transform_indices = @transform_3, window_bounds = array<i64: 32, 64>}, {pipeline_mode = #tpu.pipeline_mode<synchronous>, transform_indices = @transform_4, window_bounds = array<i64: 1, 64>}, {pipeline_mode = #tpu.pipeline_mode<synchronous>, transform_indices = @transform_5, window_bounds = array<i64: 64, 128>}, {pipeline_mode = #tpu.pipeline_mode<synchronous>, transform_indices = @transform_6, window_bounds = array<i64: 1, 128>}, {pipeline_mode = #tpu.pipeline_mode<synchronous>, transform_indices = @transform_7, window_bounds = array<i64: 128, 256>}, {pipeline_mode = #tpu.pipeline_mode<synchronous>, transform_indices = @transform_8, window_bounds = array<i64: 1, 256>}, {pipeline_mode = #tpu.pipeline_mode<synchronous>, transform_indices = @transform_9, window_bounds = array<i64: 256, 32>}, {pipeline_mode = #tpu.pipeline_mode<synchronous>, transform_indices = @transform_10, window_bounds = array<i64: 1, 32>}, {transform_indices = @transform_11, window_bounds = array<i64: 40, 32>}]} {
    %c0 = arith.constant 0 : index
    %c0_0 = arith.constant 0 : index
    %0 = vector.load %arg1[%c0, %c0_0] : memref<40x8xf32, #tpu.memory_space<vmem>>, vector<40x8xf32>
    %c0_1 = arith.constant 0 : index
    %c0_2 = arith.constant 0 : index
    %1 = vector.load %arg2[%c0_1, %c0_2] : memref<8x32xf32, #tpu.memory_space<vmem>>, vector<8x32xf32>
    %cst = arith.constant dense<0.000000e+00> : vector<40x32xf32>
    %2 = tpu.matmul %0, %1, %cst {dimension_numbers = #tpu.dot_dimension_numbers<[1], [0], [0], [1], [0, 0, 1, 1], [], []>} : vector<40x8xf32>, vector<8x32xf32>, vector<40x32xf32> -> vector<40x32xf32>
    %c0_3 = arith.constant 0 : index
    %c0_4 = arith.constant 0 : index
    %3 = vector.load %arg3[%c0_3, %c0_4] : memref<1x32xf32, #tpu.memory_space<vmem>>, vector<1x32xf32>
    %4 = vector.broadcast %3 : vector<1x32xf32> to vector<40x32xf32>
    %5 = arith.addf %2, %4 : vector<40x32xf32>
    %cst_5 = arith.constant 0.000000e+00 : f32
    %6 = vector.broadcast %cst_5 : f32 to vector<40x32xf32>
    %7 = arith.maximumf %5, %6 : vector<40x32xf32>
    %cst_6 = arith.constant dense<0.000000e+00> : vector<40xf32>
    %8 = vector.multi_reduction <add>, %7, %cst_6 [1] : vector<40x32xf32> to vector<40xf32>
    %9 = vector.shape_cast %8 : vector<40xf32> to vector<40x1xf32>
    %cst_7 = arith.constant 3.200000e+01 : f32
    %10 = vector.broadcast %cst_7 : f32 to vector<40x1xf32>
    %11 = arith.divf %9, %10 : vector<40x1xf32>
    %12 = vector.broadcast %11 : vector<40x1xf32> to vector<40x32xf32>
    %13 = arith.subf %7, %12 : vector<40x32xf32>
    %14 = arith.mulf %13, %13 : vector<40x32xf32>
    %cst_8 = arith.constant dense<0.000000e+00> : vector<40xf32>
    %15 = vector.multi_reduction <add>, %14, %cst_8 [1] : vector<40x32xf32> to vector<40xf32>
    %16 = vector.shape_cast %15 : vector<40xf32> to vector<40x1xf32>
    %cst_9 = arith.constant 3.200000e+01 : f32
    %17 = vector.broadcast %cst_9 : f32 to vector<40x1xf32>
    %18 = arith.divf %16, %17 : vector<40x1xf32>
    %19 = vector.broadcast %11 : vector<40x1xf32> to vector<40x32xf32>
    %20 = arith.subf %7, %19 : vector<40x32xf32>
    %cst_10 = arith.constant 9.99999974E-6 : f32
    %21 = vector.broadcast %cst_10 : f32 to vector<40x1xf32>
    %22 = arith.addf %18, %21 : vector<40x1xf32>
    %23 = math.rsqrt %22 : vector<40x1xf32>
    %24 = vector.broadcast %23 : vector<40x1xf32> to vector<40x32xf32>
    %25 = arith.mulf %20, %24 : vector<40x32xf32>
    %c0_11 = arith.constant 0 : index
    %c0_12 = arith.constant 0 : index
    %26 = vector.load %arg4[%c0_11, %c0_12] : memref<32x64xf32, #tpu.memory_space<vmem>>, vector<32x64xf32>
    %cst_13 = arith.constant dense<0.000000e+00> : vector<40x64xf32>
    %27 = tpu.matmul %25, %26, %cst_13 {dimension_numbers = #tpu.dot_dimension_numbers<[1], [0], [0], [1], [0, 0, 1, 1], [], []>} : vector<40x32xf32>, vector<32x64xf32>, vector<40x64xf32> -> vector<40x64xf32>
    %c0_14 = arith.constant 0 : index
    %c0_15 = arith.constant 0 : index
    %28 = vector.load %arg5[%c0_14, %c0_15] : memref<1x64xf32, #tpu.memory_space<vmem>>, vector<1x64xf32>
    %29 = vector.broadcast %28 : vector<1x64xf32> to vector<40x64xf32>
    %30 = arith.addf %27, %29 : vector<40x64xf32>
    %cst_16 = arith.constant 0.000000e+00 : f32
    %31 = vector.broadcast %cst_16 : f32 to vector<40x64xf32>
    %32 = arith.maximumf %30, %31 : vector<40x64xf32>
    %cst_17 = arith.constant dense<0.000000e+00> : vector<40xf32>
    %33 = vector.multi_reduction <add>, %32, %cst_17 [1] : vector<40x64xf32> to vector<40xf32>
    %34 = vector.shape_cast %33 : vector<40xf32> to vector<40x1xf32>
    %cst_18 = arith.constant 6.400000e+01 : f32
    %35 = vector.broadcast %cst_18 : f32 to vector<40x1xf32>
    %36 = arith.divf %34, %35 : vector<40x1xf32>
    %37 = vector.broadcast %36 : vector<40x1xf32> to vector<40x64xf32>
    %38 = arith.subf %32, %37 : vector<40x64xf32>
    %39 = arith.mulf %38, %38 : vector<40x64xf32>
    %cst_19 = arith.constant dense<0.000000e+00> : vector<40xf32>
    %40 = vector.multi_reduction <add>, %39, %cst_19 [1] : vector<40x64xf32> to vector<40xf32>
    %41 = vector.shape_cast %40 : vector<40xf32> to vector<40x1xf32>
    %cst_20 = arith.constant 6.400000e+01 : f32
    %42 = vector.broadcast %cst_20 : f32 to vector<40x1xf32>
    %43 = arith.divf %41, %42 : vector<40x1xf32>
    %44 = vector.broadcast %36 : vector<40x1xf32> to vector<40x64xf32>
    %45 = arith.subf %32, %44 : vector<40x64xf32>
    %cst_21 = arith.constant 9.99999974E-6 : f32
    %46 = vector.broadcast %cst_21 : f32 to vector<40x1xf32>
    %47 = arith.addf %43, %46 : vector<40x1xf32>
    %48 = math.rsqrt %47 : vector<40x1xf32>
    %49 = vector.broadcast %48 : vector<40x1xf32> to vector<40x64xf32>
    %50 = arith.mulf %45, %49 : vector<40x64xf32>
    %c0_22 = arith.constant 0 : index
    %c0_23 = arith.constant 0 : index
    %51 = vector.load %arg6[%c0_22, %c0_23] : memref<64x128xf32, #tpu.memory_space<vmem>>, vector<64x128xf32>
    %cst_24 = arith.constant dense<0.000000e+00> : vector<40x128xf32>
    %52 = tpu.matmul %50, %51, %cst_24 {dimension_numbers = #tpu.dot_dimension_numbers<[1], [0], [0], [1], [0, 0, 1, 1], [], []>} : vector<40x64xf32>, vector<64x128xf32>, vector<40x128xf32> -> vector<40x128xf32>
    %c0_25 = arith.constant 0 : index
    %c0_26 = arith.constant 0 : index
    %53 = vector.load %arg7[%c0_25, %c0_26] : memref<1x128xf32, #tpu.memory_space<vmem>>, vector<1x128xf32>
    %54 = vector.broadcast %53 : vector<1x128xf32> to vector<40x128xf32>
    %55 = arith.addf %52, %54 : vector<40x128xf32>
    %cst_27 = arith.constant 0.000000e+00 : f32
    %56 = vector.broadcast %cst_27 : f32 to vector<40x128xf32>
    %57 = arith.maximumf %55, %56 : vector<40x128xf32>
    %cst_28 = arith.constant dense<0.000000e+00> : vector<40xf32>
    %58 = vector.multi_reduction <add>, %57, %cst_28 [1] : vector<40x128xf32> to vector<40xf32>
    %59 = vector.shape_cast %58 : vector<40xf32> to vector<40x1xf32>
    %cst_29 = arith.constant 1.280000e+02 : f32
    %60 = vector.broadcast %cst_29 : f32 to vector<40x1xf32>
    %61 = arith.divf %59, %60 : vector<40x1xf32>
    %62 = vector.broadcast %61 : vector<40x1xf32> to vector<40x128xf32>
    %63 = arith.subf %57, %62 : vector<40x128xf32>
    %64 = arith.mulf %63, %63 : vector<40x128xf32>
    %cst_30 = arith.constant dense<0.000000e+00> : vector<40xf32>
    %65 = vector.multi_reduction <add>, %64, %cst_30 [1] : vector<40x128xf32> to vector<40xf32>
    %66 = vector.shape_cast %65 : vector<40xf32> to vector<40x1xf32>
    %cst_31 = arith.constant 1.280000e+02 : f32
    %67 = vector.broadcast %cst_31 : f32 to vector<40x1xf32>
    %68 = arith.divf %66, %67 : vector<40x1xf32>
    %69 = vector.broadcast %61 : vector<40x1xf32> to vector<40x128xf32>
    %70 = arith.subf %57, %69 : vector<40x128xf32>
    %cst_32 = arith.constant 9.99999974E-6 : f32
    %71 = vector.broadcast %cst_32 : f32 to vector<40x1xf32>
    %72 = arith.addf %68, %71 : vector<40x1xf32>
    %73 = math.rsqrt %72 : vector<40x1xf32>
    %74 = vector.broadcast %73 : vector<40x1xf32> to vector<40x128xf32>
    %75 = arith.mulf %70, %74 : vector<40x128xf32>
    %c0_33 = arith.constant 0 : index
    %c0_34 = arith.constant 0 : index
    %76 = vector.load %arg8[%c0_33, %c0_34] : memref<128x256xf32, #tpu.memory_space<vmem>>, vector<128x256xf32>
    %cst_35 = arith.constant dense<0.000000e+00> : vector<40x256xf32>
    %77 = tpu.matmul %75, %76, %cst_35 {dimension_numbers = #tpu.dot_dimension_numbers<[1], [0], [0], [1], [0, 0, 1, 1], [], []>} : vector<40x128xf32>, vector<128x256xf32>, vector<40x256xf32> -> vector<40x256xf32>
    %c0_36 = arith.constant 0 : index
    %c0_37 = arith.constant 0 : index
    %78 = vector.load %arg9[%c0_36, %c0_37] : memref<1x256xf32, #tpu.memory_space<vmem>>, vector<1x256xf32>
    %79 = vector.broadcast %78 : vector<1x256xf32> to vector<40x256xf32>
    %80 = arith.addf %77, %79 : vector<40x256xf32>
    %cst_38 = arith.constant 0.000000e+00 : f32
    %81 = vector.broadcast %cst_38 : f32 to vector<40x256xf32>
    %82 = arith.maximumf %80, %81 : vector<40x256xf32>
    %cst_39 = arith.constant dense<0.000000e+00> : vector<40xf32>
    %83 = vector.multi_reduction <add>, %82, %cst_39 [1] : vector<40x256xf32> to vector<40xf32>
    %84 = vector.shape_cast %83 : vector<40xf32> to vector<40x1xf32>
    %cst_40 = arith.constant 2.560000e+02 : f32
    %85 = vector.broadcast %cst_40 : f32 to vector<40x1xf32>
    %86 = arith.divf %84, %85 : vector<40x1xf32>
    %87 = vector.broadcast %86 : vector<40x1xf32> to vector<40x256xf32>
    %88 = arith.subf %82, %87 : vector<40x256xf32>
    %89 = arith.mulf %88, %88 : vector<40x256xf32>
    %cst_41 = arith.constant dense<0.000000e+00> : vector<40xf32>
    %90 = vector.multi_reduction <add>, %89, %cst_41 [1] : vector<40x256xf32> to vector<40xf32>
    %91 = vector.shape_cast %90 : vector<40xf32> to vector<40x1xf32>
    %cst_42 = arith.constant 2.560000e+02 : f32
    %92 = vector.broadcast %cst_42 : f32 to vector<40x1xf32>
    %93 = arith.divf %91, %92 : vector<40x1xf32>
    %94 = vector.broadcast %86 : vector<40x1xf32> to vector<40x256xf32>
    %95 = arith.subf %82, %94 : vector<40x256xf32>
    %cst_43 = arith.constant 9.99999974E-6 : f32
    %96 = vector.broadcast %cst_43 : f32 to vector<40x1xf32>
    %97 = arith.addf %93, %96 : vector<40x1xf32>
    %98 = math.rsqrt %97 : vector<40x1xf32>
    %99 = vector.broadcast %98 : vector<40x1xf32> to vector<40x256xf32>
    %100 = arith.mulf %95, %99 : vector<40x256xf32>
    %c0_44 = arith.constant 0 : index
    %c0_45 = arith.constant 0 : index
    %101 = vector.load %arg10[%c0_44, %c0_45] : memref<256x32xf32, #tpu.memory_space<vmem>>, vector<256x32xf32>
    %cst_46 = arith.constant dense<0.000000e+00> : vector<40x32xf32>
    %102 = tpu.matmul %100, %101, %cst_46 {dimension_numbers = #tpu.dot_dimension_numbers<[1], [0], [0], [1], [0, 0, 1, 1], [], []>} : vector<40x256xf32>, vector<256x32xf32>, vector<40x32xf32> -> vector<40x32xf32>
    %c0_47 = arith.constant 0 : index
    %c0_48 = arith.constant 0 : index
    %103 = vector.load %arg11[%c0_47, %c0_48] : memref<1x32xf32, #tpu.memory_space<vmem>>, vector<1x32xf32>
    %104 = vector.broadcast %103 : vector<1x32xf32> to vector<40x32xf32>
    %105 = arith.addf %102, %104 : vector<40x32xf32>
    %c0_49 = arith.constant 0 : index
    %c0_50 = arith.constant 0 : index
    %106 = vector.load %arg12[%c0_49, %c0_50] : memref<40x32xf32, #tpu.memory_space<vmem>>, vector<40x32xf32>
    tpu.vector_store %arg12[%c0_49, %c0_50], %105 {strides = array<i32>} : memref<40x32xf32, #tpu.memory_space<vmem>>, vector<40x32xf32>,
    return
  }
  func.func @transform_0(%arg0: i32) -> (i32, i32) {
    %c0_i32 = arith.constant 0 : i32
    %c0_i32_0 = arith.constant 0 : i32
    return %arg0, %c0_i32 : i32, i32
  }
  func.func @transform_1(%arg0: i32) -> (i32, i32) {
    %c0_i32 = arith.constant 0 : i32
    %c0_i32_0 = arith.constant 0 : i32
    %c0_i32_1 = arith.constant 0 : i32
    return %c0_i32, %c0_i32_0 : i32, i32
  }
  func.func @transform_2(%arg0: i32) -> (i32, i32) {
    %c0_i32 = arith.constant 0 : i32
    %c0_i32_0 = arith.constant 0 : i32
    %c0_i32_1 = arith.constant 0 : i32
    return %c0_i32, %c0_i32_0 : i32, i32
  }
  func.func @transform_3(%arg0: i32) -> (i32, i32) {
    %c0_i32 = arith.constant 0 : i32
    %c0_i32_0 = arith.constant 0 : i32
    %c0_i32_1 = arith.constant 0 : i32
    return %c0_i32, %c0_i32_0 : i32, i32
  }
  func.func @transform_4(%arg0: i32) -> (i32, i32) {
    %c0_i32 = arith.constant 0 : i32
    %c0_i32_0 = arith.constant 0 : i32
    %c0_i32_1 = arith.constant 0 : i32
    return %c0_i32, %c0_i32_0 : i32, i32
  }
  func.func @transform_5(%arg0: i32) -> (i32, i32) {
    %c0_i32 = arith.constant 0 : i32
    %c0_i32_0 = arith.constant 0 : i32
    %c0_i32_1 = arith.constant 0 : i32
    return %c0_i32, %c0_i32_0 : i32, i32
  }
  func.func @transform_6(%arg0: i32) -> (i32, i32) {
    %c0_i32 = arith.constant 0 : i32
    %c0_i32_0 = arith.constant 0 : i32
    %c0_i32_1 = arith.constant 0 : i32
    return %c0_i32, %c0_i32_0 : i32, i32
  }
  func.func @transform_7(%arg0: i32) -> (i32, i32) {
    %c0_i32 = arith.constant 0 : i32
    %c0_i32_0 = arith.constant 0 : i32
    %c0_i32_1 = arith.constant 0 : i32
    return %c0_i32, %c0_i32_0 : i32, i32
  }
  func.func @transform_8(%arg0: i32) -> (i32, i32) {
    %c0_i32 = arith.constant 0 : i32
    %c0_i32_0 = arith.constant 0 : i32
    %c0_i32_1 = arith.constant 0 : i32
    return %c0_i32, %c0_i32_0 : i32, i32
  }
  func.func @transform_9(%arg0: i32) -> (i32, i32) {
    %c0_i32 = arith.constant 0 : i32
    %c0_i32_0 = arith.constant 0 : i32
    %c0_i32_1 = arith.constant 0 : i32
    return %c0_i32, %c0_i32_0 : i32, i32
  }
  func.func @transform_10(%arg0: i32) -> (i32, i32) {
    %c0_i32 = arith.constant 0 : i32
    %c0_i32_0 = arith.constant 0 : i32
    %c0_i32_1 = arith.constant 0 : i32
    return %c0_i32, %c0_i32_0 : i32, i32
  }
  func.func @transform_11(%arg0: i32) -> (i32, i32) {
    %c0_i32 = arith.constant 0 : i32
    %c0_i32_0 = arith.constant 0 : i32
    return %arg0, %c0_i32 : i32, i32
  }
}

</mosaic_0001>

<llo_original>
// kernel: tpu_custom_call.1
$region0: #{tpu_custom_call.1}
  #allocation0 [shape = 'u32[]', space=smem, size = 0x4, offset = 0x4, fixed_abs, tag = 'smem constant byte address 0x4 - core index']
  #allocation1 [shape = 'u32[144,128]{1,0:T(1,128)}', space=vmem, size = 0x12000, scoped, tag = 'internal scratch']
  %s0 = inlined_call_operand.vmem [shape: f32[40,8], index: 0, kind: input, shape index: {}]
  %s1 = inlined_call_operand.vmem [shape: f32[8,32], index: 1, kind: input, shape index: {}]
  %s2 = inlined_call_operand.vmem [shape: f32[1,32], index: 2, kind: input, shape index: {}]
  %s3 = inlined_call_operand.hbm [shape: f32[32,64], index: 3, kind: input, shape index: {}]
  %s4 = inlined_call_operand.vmem [shape: f32[1,64], index: 4, kind: input, shape index: {}]
  %s5 = inlined_call_operand.vmem [shape: f32[64,128], index: 5, kind: input, shape index: {}]
  %s6 = inlined_call_operand.vmem [shape: f32[1,128], index: 6, kind: input, shape index: {}]
  %s7 = inlined_call_operand.vmem [shape: f32[128,256], index: 7, kind: input, shape index: {}]
  %s8 = inlined_call_operand.vmem [shape: f32[1,256], index: 8, kind: input, shape index: {}]
  %s9 = inlined_call_operand.vmem [shape: f32[256,32], index: 9, kind: input, shape index: {}]
  %s10 = inlined_call_operand.vmem [shape: f32[1,32], index: 10, kind: input, shape index: {}]
  %s11 = inlined_call_operand.vmem [shape: f32[40,32], index: 11, kind: output, shape index: {}]
  %s12 = sld [smem:[#allocation0]]
  $region58: #{tpu_custom_call.1} parent=0
    _
  %s14 = ssub.s32 1, %s12
  %s15 = scalar_select 0, %s14, %s12
  $region1: #{tpu_custom_call.1} parent=0
    #allocation2 [shape = 'u8[16384]{0}', space=vmem, size = 0x4000, scoped, tag = 'input window, operand 3, single buffered']
    #allocation3 [shape = 's32[1]{0}', space=sflag, size = 0x4, scoped, tag = 'scoped memory for tpu_custom_call.1']
    %16 = vsyncpa [#allocation3], 0
    // Predicated region
    $region2: #{tpu_custom_call.1} parent=1 // pred_check
      _
    $region3: #{tpu_custom_call.1} parent=1 // pred_check_branch
      %18 = sbr.rel (0) target = $region5
    $region4: #{tpu_custom_call.1} parent=1 // pred_region
      _
    $region5: #{tpu_custom_call.1} parent=1 // pred_fallthru
      _
    // Predicated region
    $region6: #{tpu_custom_call.1} parent=1 // pred_check
      _
    $region7: #{tpu_custom_call.1} parent=1 // pred_check_branch
      %20 = sbr.rel (0) target = $region9
    $region8: #{tpu_custom_call.1} parent=1 // pred_region
      _
    $region9: #{tpu_custom_call.1} parent=1 // pred_fallthru
      _
    // Predicated region
    $region10: #{tpu_custom_call.1} parent=1 // pred_check
      _
    $region11: #{tpu_custom_call.1} parent=1 // pred_check_branch
      %22 = sbr.rel (0) target = $region13
    $region12: #{tpu_custom_call.1} parent=1 // pred_region
      _
    $region13: #{tpu_custom_call.1} parent=1 // pred_fallthru
      _
    // Predicated region
    $region14: #{tpu_custom_call.1} parent=1 // pred_check
      _
    $region15: #{tpu_custom_call.1} parent=1 // pred_check_branch
      %24 = sbr.rel (0) target = $region17
    $region16: #{tpu_custom_call.1} parent=1 // pred_region
      %s26 = ssub.s32 512, 512
      %27 = vsyncadd [#allocation3], %s26
      %s28 = sshll.u32 [#allocation2], 4
      %s29 = int_to_ptr.vmem [resolvable:$true] %s28
      %34 = dma.hbm_to_vmem [thread:$0]  %s3, 512, %s29, [#allocation3], 128, 128, 8
    $region17: #{tpu_custom_call.1} parent=1 // pred_fallthru
      _
    // Predicated region
    $region18: #{tpu_custom_call.1} parent=1 // pred_check
      _
    $region19: #{tpu_custom_call.1} parent=1 // pred_check_branch
      %36 = sbr.rel (0) target = $region21
    $region20: #{tpu_custom_call.1} parent=1 // pred_region
      _
    $region21: #{tpu_custom_call.1} parent=1 // pred_fallthru
      _
    // Predicated region
    $region22: #{tpu_custom_call.1} parent=1 // pred_check
      _
    $region23: #{tpu_custom_call.1} parent=1 // pred_check_branch
      %38 = sbr.rel (0) target = $region25
    $region24: #{tpu_custom_call.1} parent=1 // pred_region
      _
    $region25: #{tpu_custom_call.1} parent=1 // pred_fallthru
      _
    // Predicated region
    $region26: #{tpu_custom_call.1} parent=1 // pred_check
      _
    $region27: #{tpu_custom_call.1} parent=1 // pred_check_branch
      %40 = sbr.rel (0) target = $region29
    $region28: #{tpu_custom_call.1} parent=1 // pred_region
      _
    $region29: #{tpu_custom_call.1} parent=1 // pred_fallthru
      _
    // Predicated region
    $region30: #{tpu_custom_call.1} parent=1 // pred_check
      _
    $region31: #{tpu_custom_call.1} parent=1 // pred_check_branch
      %42 = sbr.rel (0) target = $region33
    $region32: #{tpu_custom_call.1} parent=1 // pred_region
      _
    $region33: #{tpu_custom_call.1} parent=1 // pred_fallthru
      _
    // Predicated region
    $region34: #{tpu_custom_call.1} parent=1 // pred_check
      _
    $region35: #{tpu_custom_call.1} parent=1 // pred_check_branch
      %44 = sbr.rel (0) target = $region37
    $region36: #{tpu_custom_call.1} parent=1 // pred_region
      _
    $region37: #{tpu_custom_call.1} parent=1 // pred_fallthru
      _
    // Predicated region
    $region38: #{tpu_custom_call.1} parent=1 // pred_check
      _
    $region39: #{tpu_custom_call.1} parent=1 // pred_check_branch
      %46 = sbr.rel (0) target = $region41
    $region40: #{tpu_custom_call.1} parent=1 // pred_region
      _
    $region41: #{tpu_custom_call.1} parent=1 // pred_fallthru
      _
    // Predicated region
    $region42: #{tpu_custom_call.1} parent=1 // pred_check
      _
    $region43: #{tpu_custom_call.1} parent=1 // pred_check_branch
      %48 = sbr.rel (0) target = $region45
    $region44: #{tpu_custom_call.1} parent=1 // pred_region
      _
    $region45: #{tpu_custom_call.1} parent=1 // pred_fallthru
      _
    // Predicated region
    $region46: #{tpu_custom_call.1} parent=1 // pred_check
      _
    $region47: #{tpu_custom_call.1} parent=1 // pred_check_branch
      %50 = sbr.rel (0) target = $region49
    $region48: #{tpu_custom_call.1} parent=1 // pred_region
      %51 = dma.done [#allocation3], 512
    $region49: #{tpu_custom_call.1} parent=1 // pred_fallthru
      _
    %v52 = vld [vmem:[%s0] sm:$0xff]
    %v53 = vld [vmem:[%s0 + $0x8] sm:$0xff]
    %v54 = vld [vmem:[%s0 + $0x10] sm:$0xff]
    %v55 = vld [vmem:[%s0 + $0x18] sm:$0xff]
    %v56 = vld [vmem:[%s0 + $0x20] sm:$0xff]
    %v57 = vld [vmem:[%s1] sm:$0xff]
    %v58 = vld [vmem:[%s2] sm:$0x1]
    %v60 = vlaneseq
    %v61 = vshrl.u32 %v60, 7
    %v62 = vsub.s32 0, %v61
    %v63 = vrot.slane %v58, %v62
    %vm65 = vcmask 64512
    %v67 = vsel %vm65, %v52, 0
    %v70 = vsel %vm65, %v53, 0
    %v73 = vsel %vm65, %v54, 0
    %v76 = vsel %vm65, %v55, 0
    %v79 = vsel %vm65, %v56, 0
    %81 = vmatprep.subr.mxu0 0.0
    %82 = vmatpush1.msra.mxu0 %v57
    %83 = vmatprep.subr.mxu0 0.0
    %84 = vmatpush1.msra.mxu0 0.0
    %85 = vmatprep.subr.mxu0 0.0
    %86 = vmatpush1.msra.mxu0 0.0
    %87 = vmatprep.subr.mxu0 0.0
    %88 = vmatpush1.msra.mxu0 0.0
    %89 = vmatprep.subr.mxu0 0.0
    %90 = vmatpush1.msra.mxu0 0.0
    %91 = vmatprep.subr.mxu0 0.0
    %92 = vmatpush1.msra.mxu0 0.0
    %93 = vmatprep.subr.mxu0 0.0
    %94 = vmatpush1.msra.mxu0 0.0
    %95 = vmatprep.subr.mxu0 0.0
    %96 = vmatpush1.msra.mxu0 0.0
    %97 = vmatprep.subr.mxu0 0.0
    %98 = vmatpush1.msra.mxu0 0.0
    %99 = vmatprep.subr.mxu0 0.0
    %100 = vmatpush1.msra.mxu0 0.0
    %101 = vmatprep.subr.mxu0 0.0
    %102 = vmatpush1.msra.mxu0 0.0
    %103 = vmatprep.subr.mxu0 0.0
    %104 = vmatpush1.msra.mxu0 0.0
    %105 = vmatprep.subr.mxu0 0.0
    %106 = vmatpush1.msra.mxu0 0.0
    %107 = vmatprep.subr.mxu0 0.0
    %108 = vmatpush1.msra.mxu0 0.0
    %109 = vmatprep.subr.mxu0 0.0
    %110 = vmatpush1.msra.mxu0 0.0
    %111 = vmatprep.subr.mxu0 0.0
    %112 = vmatpush1.msra.mxu0 0.0
    %113 = vmatprep.subr.mxu0 0.0
    %114 = vmatpush1.msra.mxu0 0.0
    %115 = vmatprep.subr.mxu0 0.0
    %116 = vmatpush1.msra.mxu0 0.0
    %117 = vmatprep.subr.mxu0 0.0
    %118 = vmatpush1.msra.mxu0 0.0
    %119 = vmatprep.subr.mxu0 0.0
    %120 = vmatpush1.msra.mxu0 0.0
    %121 = vmatprep.subr.mxu0 0.0
    %122 = vmatpush1.msra.mxu0 0.0
    %123 = vmatprep.subr.mxu0 0.0
    %124 = vmatpush1.msra.mxu0 0.0
    %125 = vmatprep.subr.mxu0 0.0
    %126 = vmatpush1.msra.mxu0 0.0
    %127 = vmatprep.subr.mxu0 0.0
    %128 = vmatpush1.msra.mxu0 0.0
    %129 = vmatprep.subr.mxu0 0.0
    %130 = vmatpush1.msra.mxu0 0.0
    %131 = vmatprep.subr.mxu0 0.0
    %132 = vmatpush1.msra.mxu0 0.0
    %133 = vmatprep.subr.mxu0 0.0
    %134 = vmatpush1.msra.mxu0 0.0
    %135 = vmatprep.subr.mxu0 0.0
    %136 = vmatpush1.msra.mxu0 0.0
    %137 = vmatprep.subr.mxu0 0.0
    %138 = vmatpush1.msra.mxu0 0.0
    %139 = vmatprep.subr.mxu0 0.0
    %140 = vmatpush1.msra.mxu0 0.0
    %141 = vmatprep.subr.mxu0 0.0
    %142 = vmatpush1.msra.mxu0 0.0
    %143 = vmatprep.subr.mxu0 0.0
    %144 = vmatpush1.msra.mxu0 0.0
    %145 = vmatprep.mubr.f32.mxu0 0.0
    %146 = vmatmul.mubr.f32.gmra.mrb[0].mxu0 %v67
    %v147 = vpop.f32.mrb[0].mxu0
    %v148 = vadd.f32 %v63, %v147
    %v149 = vpop.f32.mrb[0].mxu0
    %150 = vmatprep.mubr.f32.mxu0 0.0
    %151 = vmatmul.mubr.f32.gmra.mrb[0].mxu0 %v70
    %v152 = vpop.f32.mrb[0].mxu0
    %v153 = vadd.f32 %v63, %v152
    %v154 = vpop.f32.mrb[0].mxu0
    %155 = vmatprep.mubr.f32.mxu0 0.0
    %156 = vmatmul.mubr.f32.gmra.mrb[0].mxu0 %v73
    %v157 = vpop.f32.mrb[0].mxu0
    %v158 = vadd.f32 %v63, %v157
    %v159 = vpop.f32.mrb[0].mxu0
    %160 = vmatprep.mubr.f32.mxu0 0.0
    %161 = vmatmul.mubr.f32.gmra.mrb[0].mxu0 %v76
    %v162 = vpop.f32.mrb[0].mxu0
    %v163 = vadd.f32 %v63, %v162
    %v164 = vpop.f32.mrb[0].mxu0
    %165 = vmatprep.mubr.f32.mxu0 0.0
    %166 = vmatmul.mubr.f32.gmra.mrb[0].mxu0 %v79
    %v167 = vpop.f32.mrb[0].mxu0
    %v168 = vadd.f32 %v63, %v167
    %v169 = vpop.f32.mrb[0].mxu0
    %170 = vdwg.mxu0
    %v171 = vmax.f32 %v148, 0.0
    %v172 = vmax.f32 %v153, 0.0
    %v173 = vmax.f32 %v158, 0.0
    %v174 = vmax.f32 %v163, 0.0
    %v175 = vmax.f32 %v168, 0.0
    %vm176 = vcmask 261120
    %v177 = vsel %vm176, %v171, 0.0
    %178 = vadd.xlane.f32.xlu0 %v177
    %v179 = vpop.xlane.xlu0 %178
    %v180 = vsel %vm176, %v172, 0.0
    %181 = vadd.xlane.f32.xlu0 %v180
    %v182 = vpop.xlane.xlu0 %181
    %v183 = vsel %vm176, %v173, 0.0
    %184 = vadd.xlane.f32.xlu0 %v183
    %v185 = vpop.xlane.xlu0 %184
    %v186 = vsel %vm176, %v174, 0.0
    %187 = vadd.xlane.f32.xlu0 %v186
    %v188 = vpop.xlane.xlu0 %187
    %v189 = vsel %vm176, %v175, 0.0
    %190 = vadd.xlane.f32.xlu0 %v189
    %v191 = vpop.xlane.xlu0 %190
    %v192 = vrcp.pop 32.0
    %v193 = vmul.f32 %v179, %v192
    %v194 = vmul.f32 %v182, %v192
    %v195 = vmul.f32 %v185, %v192
    %v196 = vmul.f32 %v188, %v192
    %v197 = vmul.f32 %v191, %v192
    %v198 = vsub.f32 %v171, %v193
    %v199 = vsub.f32 %v172, %v194
    %v200 = vsub.f32 %v173, %v195
    %v201 = vsub.f32 %v174, %v196
    %v202 = vsub.f32 %v175, %v197
    %v203 = vmul.f32 %v198, %v198
    %v204 = vmul.f32 %v199, %v199
    %v205 = vmul.f32 %v200, %v200
    %v206 = vmul.f32 %v201, %v201
    %v207 = vmul.f32 %v202, %v202
    %v208 = vsel %vm176, %v203, 0.0
    %209 = vadd.xlane.f32.xlu0 %v208
    %v210 = vpop.xlane.xlu0 %209
    %v211 = vsel %vm176, %v204, 0.0
    %212 = vadd.xlane.f32.xlu0 %v211
    %v213 = vpop.xlane.xlu0 %212
    %v214 = vsel %vm176, %v205, 0.0
    %215 = vadd.xlane.f32.xlu0 %v214
    %v216 = vpop.xlane.xlu0 %215
    %v217 = vsel %vm176, %v206, 0.0
    %218 = vadd.xlane.f32.xlu0 %v217
    %v219 = vpop.xlane.xlu0 %218
    %v220 = vsel %vm176, %v207, 0.0
    %221 = vadd.xlane.f32.xlu0 %v220
    %v222 = vpop.xlane.xlu0 %221
    %v223 = vmul.f32 %v210, %v192
    %v224 = vmul.f32 %v213, %v192
    %v225 = vmul.f32 %v216, %v192
    %v226 = vmul.f32 %v219, %v192
    %v227 = vmul.f32 %v222, %v192
    %v228 = vadd.f32 %v223, 1e-05
    %v229 = vadd.f32 %v224, 1e-05
    %v230 = vadd.f32 %v225, 1e-05
    %v231 = vadd.f32 %v226, 1e-05
    %v232 = vadd.f32 %v227, 1e-05
    %v233 = vrsqrt.pop %v228
    %v234 = vrsqrt.pop %v229
    %v235 = vrsqrt.pop %v230
    %v236 = vrsqrt.pop %v231
    %v237 = vrsqrt.pop %v232
    %v238 = vmul.f32 %v198, %v233
    %v239 = vmul.f32 %v199, %v234
    %v240 = vmul.f32 %v200, %v235
    %v241 = vmul.f32 %v201, %v236
    %v242 = vmul.f32 %v202, %v237
    %v243 = vld [vmem:[#allocation2] sm:$0xff]
    %v244 = vld [vmem:[#allocation2 + $0x8] sm:$0xff]
    %v245 = vld [vmem:[#allocation2 + $0x10] sm:$0xff]
    %v246 = vld [vmem:[#allocation2 + $0x18] sm:$0xff]
    %v247 = vld [vmem:[%s4] sm:$0x1]
    %v249 = vlaneseq
    %v250 = vshrl.u32 %v249, 7
    %v251 = vsub.s32 0, %v250
    %v252 = vrot.slane %v247, %v251
    %v255 = vsel %vm176, %v238, 0
    %v258 = vsel %vm176, %v239, 0
    %v261 = vsel %vm176, %v240, 0
    %v264 = vsel %vm176, %v241, 0
    %v267 = vsel %vm176, %v242, 0
    %269 = vmatprep.subr.mxu0 0.0
    %270 = vmatpush1.msra.mxu0 %v243
    %271 = vmatprep.subr.mxu0 0.0
    %272 = vmatpush1.msra.mxu0 %v244
    %273 = vmatprep.subr.mxu0 0.0
    %274 = vmatpush1.msra.mxu0 %v245
    %275 = vmatprep.subr.mxu0 0.0
    %276 = vmatpush1.msra.mxu0 %v246
    %277 = vmatprep.subr.mxu0 0.0
    %278 = vmatpush1.msra.mxu0 0.0
    %279 = vmatprep.subr.mxu0 0.0
    %280 = vmatpush1.msra.mxu0 0.0
    %281 = vmatprep.subr.mxu0 0.0
    %282 = vmatpush1.msra.mxu0 0.0
    %283 = vmatprep.subr.mxu0 0.0
    %284 = vmatpush1.msra.mxu0 0.0
    %285 = vmatprep.subr.mxu0 0.0
    %286 = vmatpush1.msra.mxu0 0.0
    %287 = vmatprep.subr.mxu0 0.0
    %288 = vmatpush1.msra.mxu0 0.0
    %289 = vmatprep.subr.mxu0 0.0
    %290 = vmatpush1.msra.mxu0 0.0
    %291 = vmatprep.subr.mxu0 0.0
    %292 = vmatpush1.msra.mxu0 0.0
    %293 = vmatprep.subr.mxu0 0.0
    %294 = vmatpush1.msra.mxu0 0.0
    %295 = vmatprep.subr.mxu0 0.0
    %296 = vmatpush1.msra.mxu0 0.0
    %297 = vmatprep.subr.mxu0 0.0
    %298 = vmatpush1.msra.mxu0 0.0
    %299 = vmatprep.subr.mxu0 0.0
    %300 = vmatpush1.msra.mxu0 0.0
    %301 = vmatprep.subr.mxu0 0.0
    %302 = vmatpush1.msra.mxu0 0.0
    %303 = vmatprep.subr.mxu0 0.0
    %304 = vmatpush1.msra.mxu0 0.0
    %305 = vmatprep.subr.mxu0 0.0
    %306 = vmatpush1.msra.mxu0 0.0
    %307 = vmatprep.subr.mxu0 0.0
    %308 = vmatpush1.msra.mxu0 0.0
    %309 = vmatprep.subr.mxu0 0.0
    %310 = vmatpush1.msra.mxu0 0.0
    %311 = vmatprep.subr.mxu0 0.0
    %312 = vmatpush1.msra.mxu0 0.0
    %313 = vmatprep.subr.mxu0 0.0
    %314 = vmatpush1.msra.mxu0 0.0
    %315 = vmatprep.subr.mxu0 0.0
    %316 = vmatpush1.msra.mxu0 0.0
    %317 = vmatprep.subr.mxu0 0.0
    %318 = vmatpush1.msra.mxu0 0.0
    %319 = vmatprep.subr.mxu0 0.0
    %320 = vmatpush1.msra.mxu0 0.0
    %321 = vmatprep.subr.mxu0 0.0
    %322 = vmatpush1.msra.mxu0 0.0
    %323 = vmatprep.subr.mxu0 0.0
    %324 = vmatpush1.msra.mxu0 0.0
    %325 = vmatprep.subr.mxu0 0.0
    %326 = vmatpush1.msra.mxu0 0.0
    %327 = vmatprep.subr.mxu0 0.0
    %328 = vmatpush1.msra.mxu0 0.0
    %329 = vmatprep.subr.mxu0 0.0
    %330 = vmatpush1.msra.mxu0 0.0
    %331 = vmatprep.subr.mxu0 0.0
    %332 = vmatpush1.msra.mxu0 0.0
    %333 = vmatprep.mubr.f32.mxu0 0.0
    %334 = vmatmul.mubr.f32.gmra.mrb[0].mxu0 %v255
    %v335 = vpop.f32.mrb[0].mxu0
    %v336 = vadd.f32 %v252, %v335
    %v337 = vpop.f32.mrb[0].mxu0
    %338 = vmatprep.mubr.f32.mxu0 0.0
    %339 = vmatmul.mubr.f32.gmra.mrb[0].mxu0 %v258
    %v340 = vpop.f32.mrb[0].mxu0
    %v341 = vadd.f32 %v252, %v340
    %v342 = vpop.f32.mrb[0].mxu0
    %343 = vmatprep.mubr.f32.mxu0 0.0
    %344 = vmatmul.mubr.f32.gmra.mrb[0].mxu0 %v261
    %v345 = vpop.f32.mrb[0].mxu0
    %v346 = vadd.f32 %v252, %v345
    %v347 = vpop.f32.mrb[0].mxu0
    %348 = vmatprep.mubr.f32.mxu0 0.0
    %349 = vmatmul.mubr.f32.gmra.mrb[0].mxu0 %v264
    %v350 = vpop.f32.mrb[0].mxu0
    %v351 = vadd.f32 %v252, %v350
    %v352 = vpop.f32.mrb[0].mxu0
    %353 = vmatprep.mubr.f32.mxu0 0.0
    %354 = vmatmul.mubr.f32.gmra.mrb[0].mxu0 %v267
    %v355 = vpop.f32.mrb[0].mxu0
    %v356 = vadd.f32 %v252, %v355
    %v357 = vpop.f32.mrb[0].mxu0
    %358 = vdwg.mxu0
    %v359 = vmax.f32 %v336, 0.0
    %v360 = vmax.f32 %v341, 0.0
    %v361 = vmax.f32 %v346, 0.0
    %v362 = vmax.f32 %v351, 0.0
    %v363 = vmax.f32 %v356, 0.0
    %vm364 = vcmask 523264
    %v365 = vsel %vm364, %v359, 0.0
    %366 = vadd.xlane.f32.xlu0 %v365
    %v367 = vpop.xlane.xlu0 %366
    %v368 = vsel %vm364, %v360, 0.0
    %369 = vadd.xlane.f32.xlu0 %v368
    %v370 = vpop.xlane.xlu0 %369
    %v371 = vsel %vm364, %v361, 0.0
    %372 = vadd.xlane.f32.xlu0 %v371
    %v373 = vpop.xlane.xlu0 %372
    %v374 = vsel %vm364, %v362, 0.0
    %375 = vadd.xlane.f32.xlu0 %v374
    %v376 = vpop.xlane.xlu0 %375
    %v377 = vsel %vm364, %v363, 0.0
    %378 = vadd.xlane.f32.xlu0 %v377
    %v379 = vpop.xlane.xlu0 %378
    %v380 = vrcp.pop 64.0
    %v381 = vmul.f32 %v367, %v380
    %v382 = vmul.f32 %v370, %v380
    %v383 = vmul.f32 %v373, %v380
    %v384 = vmul.f32 %v376, %v380
    %v385 = vmul.f32 %v379, %v380
    %v386 = vsub.f32 %v359, %v381
    %v387 = vsub.f32 %v360, %v382
    %v388 = vsub.f32 %v361, %v383
    %v389 = vsub.f32 %v362, %v384
    %v390 = vsub.f32 %v363, %v385
    %v391 = vmul.f32 %v386, %v386
    %v392 = vmul.f32 %v387, %v387
    %v393 = vmul.f32 %v388, %v388
    %v394 = vmul.f32 %v389, %v389
    %v395 = vmul.f32 %v390, %v390
    %v396 = vsel %vm364, %v391, 0.0
    %397 = vadd.xlane.f32.xlu0 %v396
    %v398 = vpop.xlane.xlu0 %397
    %v399 = vsel %vm364, %v392, 0.0
    %400 = vadd.xlane.f32.xlu0 %v399
    %v401 = vpop.xlane.xlu0 %400
    %v402 = vsel %vm364, %v393, 0.0
    %403 = vadd.xlane.f32.xlu0 %v402
    %v404 = vpop.xlane.xlu0 %403
    %v405 = vsel %vm364, %v394, 0.0
    %406 = vadd.xlane.f32.xlu0 %v405
    %v407 = vpop.xlane.xlu0 %406
    %v408 = vsel %vm364, %v395, 0.0
    %409 = vadd.xlane.f32.xlu0 %v408
    %v410 = vpop.xlane.xlu0 %409
    %v411 = vmul.f32 %v398, %v380
    %v412 = vmul.f32 %v401, %v380
    %v413 = vmul.f32 %v404, %v380
    %v414 = vmul.f32 %v407, %v380
    %v415 = vmul.f32 %v410, %v380
    %v416 = vadd.f32 %v411, 1e-05
    %v417 = vadd.f32 %v412, 1e-05
    %v418 = vadd.f32 %v413, 1e-05
    %v419 = vadd.f32 %v414, 1e-05
    %v420 = vadd.f32 %v415, 1e-05
    %v421 = vrsqrt.pop %v416
    %v422 = vrsqrt.pop %v417
    %v423 = vrsqrt.pop %v418
    %v424 = vrsqrt.pop %v419
    %v425 = vrsqrt.pop %v420
    %v426 = vmul.f32 %v386, %v421
    %v427 = vmul.f32 %v387, %v422
    %v428 = vmul.f32 %v388, %v423
    %v429 = vmul.f32 %v389, %v424
    %v430 = vmul.f32 %v390, %v425
    %v431 = vld [vmem:[%s5] sm:$0xff]
    %v432 = vld [vmem:[%s5 + $0x8] sm:$0xff]
    %v433 = vld [vmem:[%s5 + $0x10] sm:$0xff]
    %v434 = vld [vmem:[%s5 + $0x18] sm:$0xff]
    %v435 = vld [vmem:[%s5 + $0x20] sm:$0xff]
    %v436 = vld [vmem:[%s5 + $0x28] sm:$0xff]
    %v437 = vld [vmem:[%s5 + $0x30] sm:$0xff]
    %v438 = vld [vmem:[%s5 + $0x38] sm:$0xff]
    %v439 = vld [vmem:[%s6] sm:$0x1]
    %v441 = vlaneseq
    %v442 = vshrl.u32 %v441, 7
    %v443 = vsub.s32 0, %v442
    %v444 = vrot.slane %v439, %v443
    %v447 = vsel %vm364, %v426, 0
    %v450 = vsel %vm364, %v427, 0
    %v453 = vsel %vm364, %v428, 0
    %v456 = vsel %vm364, %v429, 0
    %v459 = vsel %vm364, %v430, 0
    %461 = vmatprep.subr.mxu0 0.0
    %462 = vmatpush1.msra.mxu0 %v431
    %463 = vmatprep.subr.mxu0 0.0
    %464 = vmatpush1.msra.mxu0 %v432
    %465 = vmatprep.subr.mxu0 0.0
    %466 = vmatpush1.msra.mxu0 %v433
    %467 = vmatprep.subr.mxu0 0.0
    %468 = vmatpush1.msra.mxu0 %v434
    %469 = vmatprep.subr.mxu0 0.0
    %470 = vmatpush1.msra.mxu0 %v435
    %471 = vmatprep.subr.mxu0 0.0
    %472 = vmatpush1.msra.mxu0 %v436
    %473 = vmatprep.subr.mxu0 0.0
    %474 = vmatpush1.msra.mxu0 %v437
    %475 = vmatprep.subr.mxu0 0.0
    %476 = vmatpush1.msra.mxu0 %v438
    %477 = vmatprep.subr.mxu0 0.0
    %478 = vmatpush1.msra.mxu0 0.0
    %479 = vmatprep.subr.mxu0 0.0
    %480 = vmatpush1.msra.mxu0 0.0
    %481 = vmatprep.subr.mxu0 0.0
    %482 = vmatpush1.msra.mxu0 0.0
    %483 = vmatprep.subr.mxu0 0.0
    %484 = vmatpush1.msra.mxu0 0.0
    %485 = vmatprep.subr.mxu0 0.0
    %486 = vmatpush1.msra.mxu0 0.0
    %487 = vmatprep.subr.mxu0 0.0
    %488 = vmatpush1.msra.mxu0 0.0
    %489 = vmatprep.subr.mxu0 0.0
    %490 = vmatpush1.msra.mxu0 0.0
    %491 = vmatprep.subr.mxu0 0.0
    %492 = vmatpush1.msra.mxu0 0.0
    %493 = vmatprep.subr.mxu0 0.0
    %494 = vmatpush1.msra.mxu0 0.0
    %495 = vmatprep.subr.mxu0 0.0
    %496 = vmatpush1.msra.mxu0 0.0
    %497 = vmatprep.subr.mxu0 0.0
    %498 = vmatpush1.msra.mxu0 0.0
    %499 = vmatprep.subr.mxu0 0.0
    %500 = vmatpush1.msra.mxu0 0.0
    %501 = vmatprep.subr.mxu0 0.0
    %502 = vmatpush1.msra.mxu0 0.0
    %503 = vmatprep.subr.mxu0 0.0
    %504 = vmatpush1.msra.mxu0 0.0
    %505 = vmatprep.subr.mxu0 0.0
    %506 = vmatpush1.msra.mxu0 0.0
    %507 = vmatprep.subr.mxu0 0.0
    %508 = vmatpush1.msra.mxu0 0.0
    %509 = vmatprep.subr.mxu0 0.0
    %510 = vmatpush1.msra.mxu0 0.0
    %511 = vmatprep.subr.mxu0 0.0
    %512 = vmatpush1.msra.mxu0 0.0
    %513 = vmatprep.subr.mxu0 0.0
    %514 = vmatpush1.msra.mxu0 0.0
    %515 = vmatprep.subr.mxu0 0.0
    %516 = vmatpush1.msra.mxu0 0.0
    %517 = vmatprep.subr.mxu0 0.0
    %518 = vmatpush1.msra.mxu0 0.0
    %519 = vmatprep.subr.mxu0 0.0
    %520 = vmatpush1.msra.mxu0 0.0
    %521 = vmatprep.subr.mxu0 0.0
    %522 = vmatpush1.msra.mxu0 0.0
    %523 = vmatprep.subr.mxu0 0.0
    %524 = vmatpush1.msra.mxu0 0.0
    %525 = vmatprep.mubr.f32.mxu0 0.0
    %526 = vmatmul.mubr.f32.gmra.mrb[0].mxu0 %v447
    %v527 = vpop.f32.mrb[0].mxu0
    %v528 = vadd.f32 %v444, %v527
    %v529 = vpop.f32.mrb[0].mxu0
    %530 = vmatprep.mubr.f32.mxu0 0.0
    %531 = vmatmul.mubr.f32.gmra.mrb[0].mxu0 %v450
    %v532 = vpop.f32.mrb[0].mxu0
    %v533 = vadd.f32 %v444, %v532
    %v534 = vpop.f32.mrb[0].mxu0
    %535 = vmatprep.mubr.f32.mxu0 0.0
    %536 = vmatmul.mubr.f32.gmra.mrb[0].mxu0 %v453
    %v537 = vpop.f32.mrb[0].mxu0
    %v538 = vadd.f32 %v444, %v537
    %v539 = vpop.f32.mrb[0].mxu0
    %540 = vmatprep.mubr.f32.mxu0 0.0
    %541 = vmatmul.mubr.f32.gmra.mrb[0].mxu0 %v456
    %v542 = vpop.f32.mrb[0].mxu0
    %v543 = vadd.f32 %v444, %v542
    %v544 = vpop.f32.mrb[0].mxu0
    %545 = vmatprep.mubr.f32.mxu0 0.0
    %546 = vmatmul.mubr.f32.gmra.mrb[0].mxu0 %v459
    %v547 = vpop.f32.mrb[0].mxu0
    %v548 = vadd.f32 %v444, %v547
    %v549 = vpop.f32.mrb[0].mxu0
    %550 = vdwg.mxu0
    %v551 = vmax.f32 %v528, 0.0
    %v552 = vmax.f32 %v533, 0.0
    %v553 = vmax.f32 %v538, 0.0
    %v554 = vmax.f32 %v543, 0.0
    %v555 = vmax.f32 %v548, 0.0
    %556 = vadd.xlane.f32.xlu0 %v551
    %v557 = vpop.xlane.xlu0 %556
    %558 = vadd.xlane.f32.xlu0 %v552
    %v559 = vpop.xlane.xlu0 %558
    %560 = vadd.xlane.f32.xlu0 %v553
    %v561 = vpop.xlane.xlu0 %560
    %562 = vadd.xlane.f32.xlu0 %v554
    %v563 = vpop.xlane.xlu0 %562
    %564 = vadd.xlane.f32.xlu0 %v555
    %v565 = vpop.xlane.xlu0 %564
    %v566 = vrcp.pop 128.0
    %v567 = vmul.f32 %v557, %v566
    %v568 = vmul.f32 %v559, %v566
    %v569 = vmul.f32 %v561, %v566
    %v570 = vmul.f32 %v563, %v566
    %v571 = vmul.f32 %v565, %v566
    %v572 = vsub.f32 %v551, %v567
    %v573 = vsub.f32 %v552, %v568
    %v574 = vsub.f32 %v553, %v569
    %v575 = vsub.f32 %v554, %v570
    %v576 = vsub.f32 %v555, %v571
    %v577 = vmul.f32 %v572, %v572
    %v578 = vmul.f32 %v573, %v573
    %v579 = vmul.f32 %v574, %v574
    %v580 = vmul.f32 %v575, %v575
    %v581 = vmul.f32 %v576, %v576
    %582 = vadd.xlane.f32.xlu0 %v577
    %v583 = vpop.xlane.xlu0 %582
    %584 = vadd.xlane.f32.xlu0 %v578
    %v585 = vpop.xlane.xlu0 %584
    %586 = vadd.xlane.f32.xlu0 %v579
    %v587 = vpop.xlane.xlu0 %586
    %588 = vadd.xlane.f32.xlu0 %v580
    %v589 = vpop.xlane.xlu0 %588
    %590 = vadd.xlane.f32.xlu0 %v581
    %v591 = vpop.xlane.xlu0 %590
    %v592 = vmul.f32 %v583, %v566
    %v593 = vmul.f32 %v585, %v566
    %v594 = vmul.f32 %v587, %v566
    %v595 = vmul.f32 %v589, %v566
    %v596 = vmul.f32 %v591, %v566
    %v597 = vadd.f32 %v592, 1e-05
    %v598 = vadd.f32 %v593, 1e-05
    %v599 = vadd.f32 %v594, 1e-05
    %v600 = vadd.f32 %v595, 1e-05
    %v601 = vadd.f32 %v596, 1e-05
    %v602 = vrsqrt.pop %v597
    %v603 = vrsqrt.pop %v598
    %v604 = vrsqrt.pop %v599
    %v605 = vrsqrt.pop %v600
    %v606 = vrsqrt.pop %v601
    %v607 = vmul.f32 %v572, %v602
    %v608 = vmul.f32 %v573, %v603
    %v609 = vmul.f32 %v574, %v604
    %v610 = vmul.f32 %v575, %v605
    %v611 = vmul.f32 %v576, %v606
    %v612 = vld [vmem:[%s7] sm:$0xff]
    %v613 = vld [vmem:[%s7 + $0x8] sm:$0xff]
    %v614 = vld [vmem:[%s7 + $0x10] sm:$0xff]
    %v615 = vld [vmem:[%s7 + $0x18] sm:$0xff]
    %v616 = vld [vmem:[%s7 + $0x20] sm:$0xff]
    %v617 = vld [vmem:[%s7 + $0x28] sm:$0xff]
    %v618 = vld [vmem:[%s7 + $0x30] sm:$0xff]
    %v619 = vld [vmem:[%s7 + $0x38] sm:$0xff]
    %v620 = vld [vmem:[%s7 + $0x40] sm:$0xff]
    %v621 = vld [vmem:[%s7 + $0x48] sm:$0xff]
    %v622 = vld [vmem:[%s7 + $0x50] sm:$0xff]
    %v623 = vld [vmem:[%s7 + $0x58] sm:$0xff]
    %v624 = vld [vmem:[%s7 + $0x60] sm:$0xff]
    %v625 = vld [vmem:[%s7 + $0x68] sm:$0xff]
    %v626 = vld [vmem:[%s7 + $0x70] sm:$0xff]
    %v627 = vld [vmem:[%s7 + $0x78] sm:$0xff]
    %v628 = vld [vmem:[%s7 + $0x80] sm:$0xff]
    %v629 = vld [vmem:[%s7 + $0x88] sm:$0xff]
    %v630 = vld [vmem:[%s7 + $0x90] sm:$0xff]
    %v631 = vld [vmem:[%s7 + $0x98] sm:$0xff]
    %v632 = vld [vmem:[%s7 + $0xa0] sm:$0xff]
    %v633 = vld [vmem:[%s7 + $0xa8] sm:$0xff]
    %v634 = vld [vmem:[%s7 + $0xb0] sm:$0xff]
    %v635 = vld [vmem:[%s7 + $0xb8] sm:$0xff]
    %v636 = vld [vmem:[%s7 + $0xc0] sm:$0xff]
    %v637 = vld [vmem:[%s7 + $0xc8] sm:$0xff]
    %v638 = vld [vmem:[%s7 + $0xd0] sm:$0xff]
    %v639 = vld [vmem:[%s7 + $0xd8] sm:$0xff]
    %v640 = vld [vmem:[%s7 + $0xe0] sm:$0xff]
    %v641 = vld [vmem:[%s7 + $0xe8] sm:$0xff]
    %v642 = vld [vmem:[%s7 + $0xf0] sm:$0xff]
    %v643 = vld [vmem:[%s7 + $0xf8] sm:$0xff]
    %v644 = vld [vmem:[%s8] sm:$0x3]
    %v646 = vlaneseq
    %v647 = vshrl.u32 %v646, 7
    %v648 = vsub.s32 0, %v647
    %v649 = vrot.slane %v644, %v648
    %v650 = vlaneseq
    %v651 = vshrl.u32 %v650, 7
    %v652 = vsub.s32 1, %v651
    %v653 = vrot.slane %v644, %v652
    %656 = vmatprep.subr.mxu0 %v613
    %657 = vmatpush1.msra.mxu0 %v612
    %658 = vmatprep.subr.mxu0 %v615
    %659 = vmatpush1.msra.mxu0 %v614
    %660 = vmatprep.subr.mxu0 %v617
    %661 = vmatpush1.msra.mxu0 %v616
    %662 = vmatprep.subr.mxu0 %v619
    %663 = vmatpush1.msra.mxu0 %v618
    %664 = vmatprep.subr.mxu0 %v621
    %665 = vmatpush1.msra.mxu0 %v620
    %666 = vmatprep.subr.mxu0 %v623
    %667 = vmatpush1.msra.mxu0 %v622
    %668 = vmatprep.subr.mxu0 %v625
    %669 = vmatpush1.msra.mxu0 %v624
    %670 = vmatprep.subr.mxu0 %v627
    %671 = vmatpush1.msra.mxu0 %v626
    %672 = vmatprep.subr.mxu0 %v629
    %673 = vmatpush1.msra.mxu0 %v628
    %674 = vmatprep.subr.mxu0 %v631
    %675 = vmatpush1.msra.mxu0 %v630
    %676 = vmatprep.subr.mxu0 %v633
    %677 = vmatpush1.msra.mxu0 %v632
    %678 = vmatprep.subr.mxu0 %v635
    %679 = vmatpush1.msra.mxu0 %v634
    %680 = vmatprep.subr.mxu0 %v637
    %681 = vmatpush1.msra.mxu0 %v636
    %682 = vmatprep.subr.mxu0 %v639
    %683 = vmatpush1.msra.mxu0 %v638
    %684 = vmatprep.subr.mxu0 %v641
    %685 = vmatpush1.msra.mxu0 %v640
    %686 = vmatprep.subr.mxu0 %v643
    %687 = vmatpush1.msra.mxu0 %v642
    %688 = vmatprep.subr.mxu0 0.0
    %689 = vmatpush1.msra.mxu0 0.0
    %690 = vmatprep.subr.mxu0 0.0
    %691 = vmatpush1.msra.mxu0 0.0
    %692 = vmatprep.subr.mxu0 0.0
    %693 = vmatpush1.msra.mxu0 0.0
    %694 = vmatprep.subr.mxu0 0.0
    %695 = vmatpush1.msra.mxu0 0.0
    %696 = vmatprep.subr.mxu0 0.0
    %697 = vmatpush1.msra.mxu0 0.0
    %698 = vmatprep.subr.mxu0 0.0
    %699 = vmatpush1.msra.mxu0 0.0
    %700 = vmatprep.subr.mxu0 0.0
    %701 = vmatpush1.msra.mxu0 0.0
    %702 = vmatprep.subr.mxu0 0.0
    %703 = vmatpush1.msra.mxu0 0.0
    %704 = vmatprep.subr.mxu0 0.0
    %705 = vmatpush1.msra.mxu0 0.0
    %706 = vmatprep.subr.mxu0 0.0
    %707 = vmatpush1.msra.mxu0 0.0
    %708 = vmatprep.subr.mxu0 0.0
    %709 = vmatpush1.msra.mxu0 0.0
    %710 = vmatprep.subr.mxu0 0.0
    %711 = vmatpush1.msra.mxu0 0.0
    %712 = vmatprep.subr.mxu0 0.0
    %713 = vmatpush1.msra.mxu0 0.0
    %714 = vmatprep.subr.mxu0 0.0
    %715 = vmatpush1.msra.mxu0 0.0
    %716 = vmatprep.subr.mxu0 0.0
    %717 = vmatpush1.msra.mxu0 0.0
    %718 = vmatprep.subr.mxu0 0.0
    %719 = vmatpush1.msra.mxu0 0.0
    %720 = vmatprep.mubr.f32.mxu0 0.0
    %721 = vmatmul.mubr.f32.gmra.mrb[0].mxu0 %v607
    %v722 = vpop.f32.mrb[0].mxu0
    %v723 = vadd.f32 %v649, %v722
    %v724 = vpop.f32.mrb[0].mxu0
    %v725 = vadd.f32 %v653, %v724
    %726 = vmatprep.mubr.f32.mxu0 0.0
    %727 = vmatmul.mubr.f32.gmra.mrb[0].mxu0 %v608
    %v728 = vpop.f32.mrb[0].mxu0
    %v729 = vadd.f32 %v649, %v728
    %v730 = vpop.f32.mrb[0].mxu0
    %v731 = vadd.f32 %v653, %v730
    %732 = vmatprep.mubr.f32.mxu0 0.0
    %733 = vmatmul.mubr.f32.gmra.mrb[0].mxu0 %v609
    %v734 = vpop.f32.mrb[0].mxu0
    %v735 = vadd.f32 %v649, %v734
    %v736 = vpop.f32.mrb[0].mxu0
    %v737 = vadd.f32 %v653, %v736
    %738 = vmatprep.mubr.f32.mxu0 0.0
    %739 = vmatmul.mubr.f32.gmra.mrb[0].mxu0 %v610
    %v740 = vpop.f32.mrb[0].mxu0
    %v741 = vadd.f32 %v649, %v740
    %v742 = vpop.f32.mrb[0].mxu0
    %v743 = vadd.f32 %v653, %v742
    %744 = vmatprep.mubr.f32.mxu0 0.0
    %745 = vmatmul.mubr.f32.gmra.mrb[0].mxu0 %v611
    %v746 = vpop.f32.mrb[0].mxu0
    %v747 = vadd.f32 %v649, %v746
    %v748 = vpop.f32.mrb[0].mxu0
    %v749 = vadd.f32 %v653, %v748
    %750 = vdwg.mxu0
    %v751 = vmax.f32 %v723, 0.0
    %v752 = vmax.f32 %v725, 0.0
    %v753 = vmax.f32 %v729, 0.0
    %v754 = vmax.f32 %v731, 0.0
    %v755 = vmax.f32 %v735, 0.0
    %v756 = vmax.f32 %v737, 0.0
    %v757 = vmax.f32 %v741, 0.0
    %v758 = vmax.f32 %v743, 0.0
    %v759 = vmax.f32 %v747, 0.0
    %v760 = vmax.f32 %v749, 0.0
    %v761 = vadd.f32 %v751, %v752
    %762 = vadd.xlane.f32.xlu0 %v761
    %v763 = vpop.xlane.xlu0 %762
    %v764 = vadd.f32 %v753, %v754
    %765 = vadd.xlane.f32.xlu0 %v764
    %v766 = vpop.xlane.xlu0 %765
    %v767 = vadd.f32 %v755, %v756
    %768 = vadd.xlane.f32.xlu0 %v767
    %v769 = vpop.xlane.xlu0 %768
    %v770 = vadd.f32 %v757, %v758
    %771 = vadd.xlane.f32.xlu0 %v770
    %v772 = vpop.xlane.xlu0 %771
    %v773 = vadd.f32 %v759, %v760
    %774 = vadd.xlane.f32.xlu0 %v773
    %v775 = vpop.xlane.xlu0 %774
    %v776 = vrcp.pop 256.0
    %v777 = vmul.f32 %v763, %v776
    %v778 = vmul.f32 %v766, %v776
    %v779 = vmul.f32 %v769, %v776
    %v780 = vmul.f32 %v772, %v776
    %v781 = vmul.f32 %v775, %v776
    %v782 = vsub.f32 %v751, %v777
    %v783 = vsub.f32 %v752, %v777
    %v784 = vsub.f32 %v753, %v778
    %v785 = vsub.f32 %v754, %v778
    %v786 = vsub.f32 %v755, %v779
    %v787 = vsub.f32 %v756, %v779
    %v788 = vsub.f32 %v757, %v780
    %v789 = vsub.f32 %v758, %v780
    %v790 = vsub.f32 %v759, %v781
    %v791 = vsub.f32 %v760, %v781
    %v792 = vmul.f32 %v782, %v782
    %v793 = vmul.f32 %v783, %v783
    %v794 = vmul.f32 %v784, %v784
    %v795 = vmul.f32 %v785, %v785
    %v796 = vmul.f32 %v786, %v786
    %v797 = vmul.f32 %v787, %v787
    %v798 = vmul.f32 %v788, %v788
    %v799 = vmul.f32 %v789, %v789
    %v800 = vmul.f32 %v790, %v790
    %v801 = vmul.f32 %v791, %v791
    %v802 = vadd.f32 %v792, %v793
    %803 = vadd.xlane.f32.xlu0 %v802
    %v804 = vpop.xlane.xlu0 %803
    %v805 = vadd.f32 %v794, %v795
    %806 = vadd.xlane.f32.xlu0 %v805
    %v807 = vpop.xlane.xlu0 %806
    %v808 = vadd.f32 %v796, %v797
    %809 = vadd.xlane.f32.xlu0 %v808
    %v810 = vpop.xlane.xlu0 %809
    %v811 = vadd.f32 %v798, %v799
    %812 = vadd.xlane.f32.xlu0 %v811
    %v813 = vpop.xlane.xlu0 %812
    %v814 = vadd.f32 %v800, %v801
    %815 = vadd.xlane.f32.xlu0 %v814
    %v816 = vpop.xlane.xlu0 %815
    %v817 = vmul.f32 %v804, %v776
    %v818 = vmul.f32 %v807, %v776
    %v819 = vmul.f32 %v810, %v776
    %v820 = vmul.f32 %v813, %v776
    %v821 = vmul.f32 %v816, %v776
    %v822 = vadd.f32 %v817, 1e-05
    %v823 = vadd.f32 %v818, 1e-05
    %v824 = vadd.f32 %v819, 1e-05
    %v825 = vadd.f32 %v820, 1e-05
    %v826 = vadd.f32 %v821, 1e-05
    %v827 = vrsqrt.pop %v822
    %v828 = vrsqrt.pop %v823
    %v829 = vrsqrt.pop %v824
    %v830 = vrsqrt.pop %v825
    %v831 = vrsqrt.pop %v826
    %v832 = vmul.f32 %v782, %v827
    %v833 = vmul.f32 %v783, %v827
    %v834 = vmul.f32 %v784, %v828
    %v835 = vmul.f32 %v785, %v828
    %v836 = vmul.f32 %v786, %v829
    %v837 = vmul.f32 %v787, %v829
    %v838 = vmul.f32 %v788, %v830
    %v839 = vmul.f32 %v789, %v830
    %v840 = vmul.f32 %v790, %v831
    %v841 = vmul.f32 %v791, %v831
    %v842 = vld [vmem:[%s9] sm:$0xff]
    %v843 = vld [vmem:[%s9 + $0x8] sm:$0xff]
    %v844 = vld [vmem:[%s9 + $0x10] sm:$0xff]
    %v845 = vld [vmem:[%s9 + $0x18] sm:$0xff]
    %v846 = vld [vmem:[%s9 + $0x20] sm:$0xff]
    %v847 = vld [vmem:[%s9 + $0x28] sm:$0xff]
    %v848 = vld [vmem:[%s9 + $0x30] sm:$0xff]
    %v849 = vld [vmem:[%s9 + $0x38] sm:$0xff]
    %v850 = vld [vmem:[%s9 + $0x40] sm:$0xff]
    %v851 = vld [vmem:[%s9 + $0x48] sm:$0xff]
    %v852 = vld [vmem:[%s9 + $0x50] sm:$0xff]
    %v853 = vld [vmem:[%s9 + $0x58] sm:$0xff]
    %v854 = vld [vmem:[%s9 + $0x60] sm:$0xff]
    %v855 = vld [vmem:[%s9 + $0x68] sm:$0xff]
    %v856 = vld [vmem:[%s9 + $0x70] sm:$0xff]
    %v857 = vld [vmem:[%s9 + $0x78] sm:$0xff]
    %v858 = vld [vmem:[%s9 + $0x80] sm:$0xff]
    %v859 = vld [vmem:[%s9 + $0x88] sm:$0xff]
    %v860 = vld [vmem:[%s9 + $0x90] sm:$0xff]
    %v861 = vld [vmem:[%s9 + $0x98] sm:$0xff]
    %v862 = vld [vmem:[%s9 + $0xa0] sm:$0xff]
    %v863 = vld [vmem:[%s9 + $0xa8] sm:$0xff]
    %v864 = vld [vmem:[%s9 + $0xb0] sm:$0xff]
    %v865 = vld [vmem:[%s9 + $0xb8] sm:$0xff]
    %v866 = vld [vmem:[%s9 + $0xc0] sm:$0xff]
    %v867 = vld [vmem:[%s9 + $0xc8] sm:$0xff]
    %v868 = vld [vmem:[%s9 + $0xd0] sm:$0xff]
    %v869 = vld [vmem:[%s9 + $0xd8] sm:$0xff]
    %v870 = vld [vmem:[%s9 + $0xe0] sm:$0xff]
    %v871 = vld [vmem:[%s9 + $0xe8] sm:$0xff]
    %v872 = vld [vmem:[%s9 + $0xf0] sm:$0xff]
    %v873 = vld [vmem:[%s9 + $0xf8] sm:$0xff]
    %v874 = vld [vmem:[%s10] sm:$0x1]
    %v876 = vlaneseq
    %v877 = vshrl.u32 %v876, 7
    %v878 = vsub.s32 0, %v877
    %v879 = vrot.slane %v874, %v878
    %881 = vmatprep.subr.mxu0 0.0
    %882 = vmatpush1.msra.mxu0 %v842
    %883 = vmatprep.subr.mxu0 0.0
    %884 = vmatpush1.msra.mxu0 %v843
    %885 = vmatprep.subr.mxu0 0.0
    %886 = vmatpush1.msra.mxu0 %v844
    %887 = vmatprep.subr.mxu0 0.0
    %888 = vmatpush1.msra.mxu0 %v845
    %889 = vmatprep.subr.mxu0 0.0
    %890 = vmatpush1.msra.mxu0 %v846
    %891 = vmatprep.subr.mxu0 0.0
    %892 = vmatpush1.msra.mxu0 %v847
    %893 = vmatprep.subr.mxu0 0.0
    %894 = vmatpush1.msra.mxu0 %v848
    %895 = vmatprep.subr.mxu0 0.0
    %896 = vmatpush1.msra.mxu0 %v849
    %897 = vmatprep.subr.mxu0 0.0
    %898 = vmatpush1.msra.mxu0 %v850
    %899 = vmatprep.subr.mxu0 0.0
    %900 = vmatpush1.msra.mxu0 %v851
    %901 = vmatprep.subr.mxu0 0.0
    %902 = vmatpush1.msra.mxu0 %v852
    %903 = vmatprep.subr.mxu0 0.0
    %904 = vmatpush1.msra.mxu0 %v853
    %905 = vmatprep.subr.mxu0 0.0
    %906 = vmatpush1.msra.mxu0 %v854
    %907 = vmatprep.subr.mxu0 0.0
    %908 = vmatpush1.msra.mxu0 %v855
    %909 = vmatprep.subr.mxu0 0.0
    %910 = vmatpush1.msra.mxu0 %v856
    %911 = vmatprep.subr.mxu0 0.0
    %912 = vmatpush1.msra.mxu0 %v857
    %913 = vmatprep.subr.mxu0 0.0
    %914 = vmatpush1.msra.mxu0 %v858
    %915 = vmatprep.subr.mxu0 0.0
    %916 = vmatpush1.msra.mxu0 %v859
    %917 = vmatprep.subr.mxu0 0.0
    %918 = vmatpush1.msra.mxu0 %v860
    %919 = vmatprep.subr.mxu0 0.0
    %920 = vmatpush1.msra.mxu0 %v861
    %921 = vmatprep.subr.mxu0 0.0
    %922 = vmatpush1.msra.mxu0 %v862
    %923 = vmatprep.subr.mxu0 0.0
    %924 = vmatpush1.msra.mxu0 %v863
    %925 = vmatprep.subr.mxu0 0.0
    %926 = vmatpush1.msra.mxu0 %v864
    %927 = vmatprep.subr.mxu0 0.0
    %928 = vmatpush1.msra.mxu0 %v865
    %929 = vmatprep.subr.mxu0 0.0
    %930 = vmatpush1.msra.mxu0 %v866
    %931 = vmatprep.subr.mxu0 0.0
    %932 = vmatpush1.msra.mxu0 %v867
    %933 = vmatprep.subr.mxu0 0.0
    %934 = vmatpush1.msra.mxu0 %v868
    %935 = vmatprep.subr.mxu0 0.0
    %936 = vmatpush1.msra.mxu0 %v869
    %937 = vmatprep.subr.mxu0 0.0
    %938 = vmatpush1.msra.mxu0 %v870
    %939 = vmatprep.subr.mxu0 0.0
    %940 = vmatpush1.msra.mxu0 %v871
    %941 = vmatprep.subr.mxu0 0.0
    %942 = vmatpush1.msra.mxu0 %v872
    %943 = vmatprep.subr.mxu0 0.0
    %944 = vmatpush1.msra.mxu0 %v873
    %945 = vmatprep.mubr.f32.mxu0 %v833
    %946 = vmatmul.mubr.f32.gmra.mrb[0].mxu0 %v832
    %v947 = vpop.f32.mrb[0].mxu0
    %v948 = vadd.f32 %v879, %v947
    %v949 = vpop.f32.mrb[0].mxu0
    %950 = vmatprep.mubr.f32.mxu0 %v835
    %951 = vmatmul.mubr.f32.gmra.mrb[0].mxu0 %v834
    %v952 = vpop.f32.mrb[0].mxu0
    %v953 = vadd.f32 %v879, %v952
    %v954 = vpop.f32.mrb[0].mxu0
    %955 = vmatprep.mubr.f32.mxu0 %v837
    %956 = vmatmul.mubr.f32.gmra.mrb[0].mxu0 %v836
    %v957 = vpop.f32.mrb[0].mxu0
    %v958 = vadd.f32 %v879, %v957
    %v959 = vpop.f32.mrb[0].mxu0
    %960 = vmatprep.mubr.f32.mxu0 %v839
    %961 = vmatmul.mubr.f32.gmra.mrb[0].mxu0 %v838
    %v962 = vpop.f32.mrb[0].mxu0
    %v963 = vadd.f32 %v879, %v962
    %v964 = vpop.f32.mrb[0].mxu0
    %965 = vmatprep.mubr.f32.mxu0 %v841
    %966 = vmatmul.mubr.f32.gmra.mrb[0].mxu0 %v840
    %v967 = vpop.f32.mrb[0].mxu0
    %v968 = vadd.f32 %v879, %v967
    %v969 = vpop.f32.mrb[0].mxu0
    %970 = vdwg.mxu0
    %971 = vst.msk [vmem:[%s11] sm:$0xff] %vm176, %v948
    %972 = vst.msk [vmem:[%s11 + $0x8] sm:$0xff] %vm176, %v953
    %973 = vst.msk [vmem:[%s11 + $0x10] sm:$0xff] %vm176, %v958
    %974 = vst.msk [vmem:[%s11 + $0x18] sm:$0xff] %vm176, %v963
    %975 = vst.msk [vmem:[%s11 + $0x20] sm:$0xff] %vm176, %v968
    // Predicated region
    $region50: #{tpu_custom_call.1} parent=1 // pred_check
      _
    $region51: #{tpu_custom_call.1} parent=1 // pred_check_branch
      %977 = sbr.rel (0) target = $region53
    $region52: #{tpu_custom_call.1} parent=1 // pred_region
      _
    $region53: #{tpu_custom_call.1} parent=1 // pred_fallthru
      _
    // Predicated region
    $region54: #{tpu_custom_call.1} parent=1 // pred_check
      _
    $region55: #{tpu_custom_call.1} parent=1 // pred_check_branch
      %979 = sbr.rel (0) target = $region57
    $region56: #{tpu_custom_call.1} parent=1 // pred_region
      _
    $region57: #{tpu_custom_call.1} parent=1 // pred_fallthru
      _
    %980 = vsyncpa [#allocation3], 1

</llo_original>
